<compile_context>
chip_gen: v7x
topology: tpu7x:2x2x1
jax: 0.10.0
libtpu: 0.0.40
codegen_flags: <defaults>
</compile_context>

<pallas_src>
import functools

import jax
import jax.numpy as jnp
from jax.experimental import pallas as pl
from jax.experimental.pallas import tpu as pltpu


MASK_NEG = jnp.float32(-1e30)     # additive mask for invalid time positions (finite, no NaN risk)


def _round_up(v, m):
    return (v + m - 1) // m * m


# ---------------------------------------------------------------------------
# Fused kernel: conv (all branches, im2col) + masked max-over-time + bias
#               + leaky_relu + fc + sigmoid, for one batch tile of TB rows.
# ---------------------------------------------------------------------------
def cnn_text_fused_kernel(x_ref, w_ref, b_ref, mask_ref, fcw_ref, fcb_ref, o_ref,
                          *, TB, L):
    """
    x_ref   : (TB*L, C) bf16  im2col'd embedded tokens for this batch tile
    w_ref   : (C, D)    bf16  packed im2col conv weights (zero-padded to 128 lanes)
    b_ref   : (1, D)    f32   packed conv biases (zeros in pad columns)
    mask_ref: (L, D)    f32   additive time-validity mask (0 valid / -1e30 invalid)
    fcw_ref : (1, D)    f32   fc weight row (zeros in pad columns)
    fcb_ref : (1, 1)    f32   fc bias
    o_ref   : (TB, 1)   f32   sigmoid(fc(pooled features))
    """
    D = w_ref.shape[1]

    # One lane-dense MXU pass covers every conv branch, every tap and the whole
    # batch tile (bf16 operands, f32 accumulation).
    y = jnp.dot(x_ref[...], w_ref[...], preferred_element_type=jnp.float32)  # (TB*L, D)

    # Masked max-over-time: invalid positions (t > L-K for the owning branch,
    # incl. zero-padded tail) were pre-masked on the host as an additive -1e30.
    y = y.reshape(TB, L, D) + mask_ref[...]        # (TB, L, D), mask broadcasts over batch
    pooled = jnp.max(y, axis=1)                    # (TB, D)

    # Bias + leaky_relu hoisted past the pool (bias const over time, lrelu monotone).
    h = pooled + b_ref[...]
    h = jnp.where(h > 0, h, 0.01 * h)              # F.leaky_relu (slope 0.01)
    # TODO(synk): training-mode dropout would be applied to h here.

    # Width-1 fc: VPU multiply + lane reduction instead of a 1-wide MXU matmul.
    z = jnp.sum(h * fcw_ref[...], axis=-1, keepdims=True) + fcb_ref[...]     # (TB, 1)
    o_ref[...] = jax.nn.sigmoid(z).astype(o_ref.dtype)


# ---------------------------------------------------------------------------
# Parameter construction (PyTorch layout) + one-time repacking for the kernel
# ---------------------------------------------------------------------------
class Params:
    filters = 16
    kernels = 3          # <= 3  ->  Ks = [1, 2, 3]
    dropout = 0.5
    embed_dropout = 0.2


def init_cnn_text(key, n_words, emb_dim, params):
    """Deterministic synthetic parameters in PyTorch layout (for the reference)."""
    if params.kernels <= 3:
        Ks = list(range(1, params.kernels + 1))
    else:
        Ks = list(range(1, params.kernels + 1, 2))
    keys = jax.random.split(key, 1 + 2 * len(Ks) + 2)
    embedding = jax.random.normal(keys[0], (n_words, emb_dim), jnp.float32)
    convs = []
    for i, K in enumerate(Ks):
        bound = 1.0 / (emb_dim * K) ** 0.5
        w = jax.random.uniform(keys[1 + 2 * i], (params.filters, emb_dim, K),
                               jnp.float32, -bound, bound)       # PyTorch (F, E, K)
        b = jax.random.uniform(keys[2 + 2 * i], (params.filters,),
                               jnp.float32, -bound, bound)
        convs.append((w, b))
    D = len(Ks) * params.filters
    bound = 1.0 / D ** 0.5
    fc_w = jax.random.uniform(keys[-2], (1, D), jnp.float32, -bound, bound)
    fc_b = jax.random.uniform(keys[-1], (1,), jnp.float32, -bound, bound)
    return embedding, Ks, convs, (fc_w, fc_b)


def pack_cnn_text(Ks, convs, fc, emb_dim, filters, L):
    """One-time repack: lane-padded im2col conv weight (C,D), packed bias, additive
    time-validity mask, and the fc weight as a zero-padded row. bf16 MXU operands."""
    Kmax = max(Ks)
    F = filters
    D_real = len(Ks) * F
    C = max(128, _round_up(Kmax * emb_dim, 128))   # im2col contraction dim, lane-padded
    D = max(128, _round_up(D_real, 128))           # packed feature dim, lane-padded

    w_packed = jnp.zeros((C, D), jnp.float32)
    b_packed = jnp.zeros((1, D), jnp.float32)
    fcw_row = jnp.zeros((1, D), jnp.float32)
    mask = jnp.zeros((L, D), jnp.float32)          # pad columns: always valid -> pool to 0
    t = jnp.arange(L, dtype=jnp.int32)[:, None]    # (L, 1)

    for i, ((w, b), K) in enumerate(zip(convs, Ks)):
        # PyTorch Conv1d weight (F,E,K): y[f,t] = sum_{e,k} x[t+k,e] * w[f,e,k]
        # im2col column layout xu[t, k*E+e] = x[t+k, e]  ->  W[k*E+e, col] = w[f,e,k]
        w_kef = jnp.transpose(w, (2, 1, 0)).reshape(K * emb_dim, F)   # (K*E, F)
        w_packed = w_packed.at[:K * emb_dim, i * F:(i + 1) * F].set(w_kef)
        b_packed = b_packed.at[0, i * F:(i + 1) * F].set(b)
        invalid = t > (L - K)                                          # Lout = L-K+1
        mask = mask.at[:, i * F:(i + 1) * F].set(
            jnp.broadcast_to(jnp.where(invalid, MASK_NEG, jnp.float32(0.0)), (L, F)))

    fc_w, fc_b = fc
    fcw_row = fcw_row.at[:, :D_real].set(fc_w)

    return dict(w_packed=w_packed.astype(jnp.bfloat16), b_packed=b_packed,
                mask=mask, fc_w_row=fcw_row, fc_b=fc_b.reshape(1, 1),
                Kmax=Kmax, C=C, D=D)


# ---------------------------------------------------------------------------
# Forward pass (single pallas_call, batch-tiled grid) and pure-JAX reference
# ---------------------------------------------------------------------------
def cnn_text_forward(note, embedding, packed):
    B, L = note.shape
    E = embedding.shape[1]
    Kmax, C, D = packed["Kmax"], packed["C"], packed["D"]
    assert L >= Kmax, f"sequence length {L} shorter than widest filter {Kmax}"

    # Embedding lookup (gather) + per-row im2col stay in plain JAX.
    # TODO(synk): at production vocab/seq sizes move the gather into the kernel
    # (scalar-prefetch `note` to SMEM, keep the table in HBM via pl.ANY + manual DMA).
    x = jnp.take(embedding, note, axis=0)                        # (B, L, E) f32
    xpad = jnp.pad(x, ((0, 0), (0, Kmax - 1), (0, 0)))           # per-row zero tail
    xu = jnp.concatenate([xpad[:, k:k + L, :] for k in range(Kmax)], axis=-1)
    xu = jnp.pad(xu, ((0, 0), (0, 0), (0, C - Kmax * E)))        # lane-pad to C
    xu = xu.reshape(B * L, C).astype(jnp.bfloat16)               # bf16 MXU operand

    TB = B if B < 8 else 8                                       # batch tile
    assert B % TB == 0, (B, TB)
    kernel = functools.partial(cnn_text_fused_kernel, TB=TB, L=L)

    return pl.pallas_call(
        kernel,
        out_shape=jax.ShapeDtypeStruct((B, 1), jnp.float32),
        grid=(B // TB,),
        in_specs=[
            pl.BlockSpec((TB * L, C), lambda i: (i, 0)),         # streamed per batch tile
            pl.BlockSpec((C, D), lambda i: (0, 0)),              # weights: resident
            pl.BlockSpec((1, D), lambda i: (0, 0)),
            pl.BlockSpec((L, D), lambda i: (0, 0)),
            pl.BlockSpec((1, D), lambda i: (0, 0)),
            pl.BlockSpec((1, 1), lambda i: (0, 0)),
        ],
        out_specs=pl.BlockSpec((TB, 1), lambda i: (i, 0)),
        compiler_params=pltpu.CompilerParams(
            dimension_semantics=("parallel",)),                  # shard batch across TCs (v7x)
    )(xu, packed["w_packed"], packed["b_packed"], packed["mask"],
      packed["fc_w_row"], packed["fc_b"])


def cnn_text_reference(note, embedding, Ks, convs, fc):
    """Pure-JAX reference replicating the PyTorch forward (eval mode, f32)."""
    x = jnp.take(embedding, note, axis=0)                        # (B, L, E)
    x_ncw = jnp.transpose(x, (0, 2, 1))                          # (B, E, L)
    pooled = []
    for (w, b), K in zip(convs, Ks):
        y = jax.lax.conv_general_dilated(
            x_ncw, w, window_strides=(1,), padding='VALID',
            dimension_numbers=('NCH', 'OIH', 'NCH'))
        y = y + b[None, :, None]
        y = jnp.where(y > 0, y, 0.01 * y)
        pooled.append(jnp.max(y, axis=2))
    h = jnp.concatenate(pooled, axis=1)
    fc_w, fc_b = fc
    return jax.nn.sigmoid(h @ fc_w.T + fc_b)


if __name__ == "__main__":
    params = Params()
    n_words, emb_dim = 50, 32
    B, L = 2, 16

    key = jax.random.PRNGKey(0)
    k_init, k_note = jax.random.split(key)
    embedding, Ks, convs, fc = init_cnn_text(k_init, n_words, emb_dim, params)
    packed = pack_cnn_text(Ks, convs, fc, emb_dim, params.filters, L)
    note = jax.random.randint(k_note, (B, L), 0, n_words, dtype=jnp.int32)

    out = jax.block_until_ready(cnn_text_forward(note, embedding, packed))
    ref = cnn_text_reference(note, embedding, Ks, convs, fc)

    assert out.shape == (B, 1), out.shape
    # bf16 MXU operands vs the all-f32 reference -> relaxed tolerance (per review).
    assert jnp.allclose(out, ref, atol=2e-2, rtol=2e-2), (out, ref)
    print("KERNEL_OK")
</pallas_src>

<mosaic_0001>
module attributes {stable_mosaic.version = 11 : i64} {
  func.func @cnn_text_fused_kernel(%arg0: i32, %arg1: memref<32x128xbf16, #tpu.memory_space<vmem>>, %arg2: memref<128x128xbf16, #tpu.memory_space<vmem>>, %arg3: memref<1x128xf32, #tpu.memory_space<vmem>>, %arg4: memref<16x128xf32, #tpu.memory_space<vmem>>, %arg5: memref<1x128xf32, #tpu.memory_space<vmem>>, %arg6: memref<1x1xf32, #tpu.memory_space<vmem>>, %arg7: memref<2x1xf32, #tpu.memory_space<vmem>>) attributes {dimension_semantics = [#tpu.dimension_semantics<parallel>], iteration_bounds = array<i64: 1>, scalar_prefetch = 0 : i64, scratch_operands = 0 : i64, tpu.core_type = #tpu.core_type<tc>, window_params = [{transform_indices = @transform_0, window_bounds = array<i64: 32, 128>}, {pipeline_mode = #tpu.pipeline_mode<synchronous>, transform_indices = @transform_1, window_bounds = array<i64: 128, 128>}, {pipeline_mode = #tpu.pipeline_mode<synchronous>, transform_indices = @transform_2, window_bounds = array<i64: 1, 128>}, {pipeline_mode = #tpu.pipeline_mode<synchronous>, transform_indices = @transform_3, window_bounds = array<i64: 16, 128>}, {pipeline_mode = #tpu.pipeline_mode<synchronous>, transform_indices = @transform_4, window_bounds = array<i64: 1, 128>}, {pipeline_mode = #tpu.pipeline_mode<synchronous>, transform_indices = @transform_5, window_bounds = array<i64: 1, 1>}, {transform_indices = @transform_6, window_bounds = array<i64: 2, 1>}]} {
    %c0 = arith.constant 0 : index
    %c0_0 = arith.constant 0 : index
    %0 = vector.load %arg1[%c0, %c0_0] : memref<32x128xbf16, #tpu.memory_space<vmem>>, vector<32x128xbf16>
    %c0_1 = arith.constant 0 : index
    %c0_2 = arith.constant 0 : index
    %1 = vector.load %arg2[%c0_1, %c0_2] : memref<128x128xbf16, #tpu.memory_space<vmem>>, vector<128x128xbf16>
    %cst = arith.constant dense<0.000000e+00> : vector<32x128xf32>
    %2 = tpu.matmul %0, %1, %cst {dimension_numbers = #tpu.dot_dimension_numbers<[1], [0], [0], [1], [0, 0, 1, 1], [], []>} : vector<32x128xbf16>, vector<128x128xbf16>, vector<32x128xf32> -> vector<32x128xf32>
    %3 = vector.shape_cast %2 : vector<32x128xf32> to vector<2x16x128xf32>
    %c0_3 = arith.constant 0 : index
    %c0_4 = arith.constant 0 : index
    %4 = vector.load %arg4[%c0_3, %c0_4] : memref<16x128xf32, #tpu.memory_space<vmem>>, vector<16x128xf32>
    %5 = vector.shape_cast %4 : vector<16x128xf32> to vector<1x16x128xf32>
    %6 = vector.broadcast %5 : vector<1x16x128xf32> to vector<2x16x128xf32>
    %7 = arith.addf %3, %6 : vector<2x16x128xf32>
    %cst_5 = arith.constant dense<0xFF800000> : vector<2x128xf32>
    %8 = vector.multi_reduction <maximumf>, %7, %cst_5 [1] : vector<2x16x128xf32> to vector<2x128xf32>
    %c0_6 = arith.constant 0 : index
    %c0_7 = arith.constant 0 : index
    %9 = vector.load %arg3[%c0_6, %c0_7] : memref<1x128xf32, #tpu.memory_space<vmem>>, vector<1x128xf32>
    %10 = vector.broadcast %9 : vector<1x128xf32> to vector<2x128xf32>
    %11 = arith.addf %8, %10 : vector<2x128xf32>
    %cst_8 = arith.constant 0.000000e+00 : f32
    %12 = vector.broadcast %cst_8 : f32 to vector<2x128xf32>
    %13 = arith.cmpf ogt, %11, %12 : vector<2x128xf32>
    %cst_9 = arith.constant 0.00999999977 : f32
    %14 = vector.broadcast %cst_9 : f32 to vector<2x128xf32>
    %15 = arith.mulf %14, %11 : vector<2x128xf32>
    %16 = arith.select %13, %11, %15 : vector<2x128xi1>, vector<2x128xf32>
    %c0_10 = arith.constant 0 : index
    %c0_11 = arith.constant 0 : index
    %17 = vector.load %arg5[%c0_10, %c0_11] : memref<1x128xf32, #tpu.memory_space<vmem>>, vector<1x128xf32>
    %18 = vector.broadcast %17 : vector<1x128xf32> to vector<2x128xf32>
    %19 = arith.mulf %16, %18 : vector<2x128xf32>
    %cst_12 = arith.constant dense<0.000000e+00> : vector<2xf32>
    %20 = vector.multi_reduction <add>, %19, %cst_12 [1] : vector<2x128xf32> to vector<2xf32>
    %21 = vector.shape_cast %20 : vector<2xf32> to vector<2x1xf32>
    %c0_13 = arith.constant 0 : index
    %c0_14 = arith.constant 0 : index
    %22 = vector.load %arg6[%c0_13, %c0_14] : memref<1x1xf32, #tpu.memory_space<vmem>>, vector<1x1xf32>
    %23 = vector.broadcast %22 : vector<1x1xf32> to vector<2x1xf32>
    %24 = arith.addf %21, %23 : vector<2x1xf32>
    %25 = arith.negf %24 : vector<2x1xf32>
    %26 = math.exp %25 : vector<2x1xf32>
    %cst_15 = arith.constant 1.000000e+00 : f32
    %27 = vector.broadcast %cst_15 : f32 to vector<2x1xf32>
    %28 = arith.addf %27, %26 : vector<2x1xf32>
    %29 = arith.divf %27, %28 : vector<2x1xf32>
    %c0_16 = arith.constant 0 : index
    %c0_17 = arith.constant 0 : index
    %30 = vector.load %arg7[%c0_16, %c0_17] : memref<2x1xf32, #tpu.memory_space<vmem>>, vector<2x1xf32>
    tpu.vector_store %arg7[%c0_16, %c0_17], %29 {strides = array<i32>} : memref<2x1xf32, #tpu.memory_space<vmem>>, vector<2x1xf32>,
    return
  }
  func.func @transform_0(%arg0: i32) -> (i32, i32) {
    %c0_i32 = arith.constant 0 : i32
    %c0_i32_0 = arith.constant 0 : i32
    return %arg0, %c0_i32 : i32, i32
  }
  func.func @transform_1(%arg0: i32) -> (i32, i32) {
    %c0_i32 = arith.constant 0 : i32
    %c0_i32_0 = arith.constant 0 : i32
    %c0_i32_1 = arith.constant 0 : i32
    return %c0_i32, %c0_i32_0 : i32, i32
  }
  func.func @transform_2(%arg0: i32) -> (i32, i32) {
    %c0_i32 = arith.constant 0 : i32
    %c0_i32_0 = arith.constant 0 : i32
    %c0_i32_1 = arith.constant 0 : i32
    return %c0_i32, %c0_i32_0 : i32, i32
  }
  func.func @transform_3(%arg0: i32) -> (i32, i32) {
    %c0_i32 = arith.constant 0 : i32
    %c0_i32_0 = arith.constant 0 : i32
    %c0_i32_1 = arith.constant 0 : i32
    return %c0_i32, %c0_i32_0 : i32, i32
  }
  func.func @transform_4(%arg0: i32) -> (i32, i32) {
    %c0_i32 = arith.constant 0 : i32
    %c0_i32_0 = arith.constant 0 : i32
    %c0_i32_1 = arith.constant 0 : i32
    return %c0_i32, %c0_i32_0 : i32, i32
  }
  func.func @transform_5(%arg0: i32) -> (i32, i32) {
    %c0_i32 = arith.constant 0 : i32
    %c0_i32_0 = arith.constant 0 : i32
    %c0_i32_1 = arith.constant 0 : i32
    return %c0_i32, %c0_i32_0 : i32, i32
  }
  func.func @transform_6(%arg0: i32) -> (i32, i32) {
    %c0_i32 = arith.constant 0 : i32
    %c0_i32_0 = arith.constant 0 : i32
    return %arg0, %c0_i32 : i32, i32
  }
}

</mosaic_0001>

<llo_original>
// kernel: tpu_custom_call.1
$region0: #{tpu_custom_call.1}
  #allocation0 [shape = 'u32[]', space=smem, size = 0x4, offset = 0x4, fixed_abs, tag = 'smem constant byte address 0x4 - core index']
  #allocation1 [shape = 'u32[144,128]{1,0:T(1,128)}', space=vmem, size = 0x12000, scoped, tag = 'internal scratch']
  #allocation2 [shape = 'f32[1,1]{1,0:T(1,128)S(1)}', space=vmem, size = 0x200, scoped, tag = 'scoped memory for tpu_custom_call.1']
  %s0 = inlined_call_operand.hbm [shape: bf16[32,128], index: 0, kind: input, shape index: {}]
  %s1 = inlined_call_operand.hbm [shape: bf16[128,128], index: 1, kind: input, shape index: {}]
  %s2 = inlined_call_operand.vmem [shape: f32[1,128], index: 2, kind: input, shape index: {}]
  %s3 = inlined_call_operand.hbm [shape: f32[16,128], index: 3, kind: input, shape index: {}]
  %s4 = inlined_call_operand.vmem [shape: f32[1,128], index: 4, kind: input, shape index: {}]
  %s5 = inlined_call_operand.<no memory space> [shape: f32[1,1], index: 5, kind: input, shape index: {}]
  %s6 = inlined_call_operand.vmem [shape: f32[2,1], index: 6, kind: output, shape index: {}]
  %s7 = sld [smem:[#allocation0]]
  $region46: #{tpu_custom_call.1} parent=0
    _
  %s9 = ssub.s32 1, %s7
  %s10 = scalar_select 0, %s9, %s7
  %v11 = vstv %s5
  %12 = vst [vmem:[#allocation2] sm:$0x1] %v11
  $region1: #{tpu_custom_call.1} parent=0
    #allocation3 [shape = 'u8[8192]{0}', space=vmem, size = 0x2000, scoped, tag = 'input window, operand 0, single buffered']
    #allocation4 [shape = 's32[1]{0}', space=sflag, size = 0x4, scoped, tag = 'scoped memory for tpu_custom_call.1']
    #allocation5 [shape = 'u8[32768]{0}', space=vmem, size = 0x8000, scoped, tag = 'input window, operand 1, single buffered']
    #allocation6 [shape = 's32[1]{0}', space=sflag, size = 0x4, scoped, tag = 'scoped memory for tpu_custom_call.1']
    #allocation7 [shape = 'u8[8192]{0}', space=vmem, size = 0x2000, scoped, tag = 'input window, operand 3, single buffered']
    %13 = vsyncpa [#allocation4], 0
    %14 = vsyncpa [#allocation6], 0
    // Predicated region
    $region2: #{tpu_custom_call.1} parent=1 // pred_check
      _
    $region3: #{tpu_custom_call.1} parent=1 // pred_check_branch
      %16 = sbr.rel (0) target = $region5
    $region4: #{tpu_custom_call.1} parent=1 // pred_region
      %s18 = ssub.s32 256, 256
      %19 = vsyncadd [#allocation4], %s18
      %s20 = sshll.u32 [#allocation3], 4
      %s21 = int_to_ptr.vmem [resolvable:$true] %s20
      %26 = dma.hbm_to_vmem [thread:$0]  %s0, 256, %s21, [#allocation4], 64, 64, 4
    $region5: #{tpu_custom_call.1} parent=1 // pred_fallthru
      _
    // Predicated region
    $region6: #{tpu_custom_call.1} parent=1 // pred_check
      _
    $region7: #{tpu_custom_call.1} parent=1 // pred_check_branch
      %28 = sbr.rel (0) target = $region9
    $region8: #{tpu_custom_call.1} parent=1 // pred_region
      %s30 = ssub.s32 1024, 1024
      %31 = vsyncadd [#allocation6], %s30
      %s32 = sshll.u32 [#allocation5], 4
      %s33 = int_to_ptr.vmem [resolvable:$true] %s32
      %38 = dma.hbm_to_vmem [thread:$0]  %s1, 1024, %s33, [#allocation6], 64, 64, 4
    $region9: #{tpu_custom_call.1} parent=1 // pred_fallthru
      _
    // Predicated region
    $region10: #{tpu_custom_call.1} parent=1 // pred_check
      _
    $region11: #{tpu_custom_call.1} parent=1 // pred_check_branch
      %40 = sbr.rel (0) target = $region13
    $region12: #{tpu_custom_call.1} parent=1 // pred_region
      _
    $region13: #{tpu_custom_call.1} parent=1 // pred_fallthru
      _
    // Predicated region
    $region14: #{tpu_custom_call.1} parent=1 // pred_check
      _
    $region15: #{tpu_custom_call.1} parent=1 // pred_check_branch
      %42 = sbr.rel (0) target = $region17
    $region16: #{tpu_custom_call.1} parent=1 // pred_region
      %s44 = ssub.s32 256, 256
      %45 = vsyncadd [#allocation6], %s44
      %s46 = sshll.u32 [#allocation7], 4
      %s47 = int_to_ptr.vmem [resolvable:$true] %s46
      %52 = dma.hbm_to_vmem [thread:$0]  %s3, 256, %s47, [#allocation6], 128, 128, 8
    $region17: #{tpu_custom_call.1} parent=1 // pred_fallthru
      _
    // Predicated region
    $region18: #{tpu_custom_call.1} parent=1 // pred_check
      _
    $region19: #{tpu_custom_call.1} parent=1 // pred_check_branch
      %54 = sbr.rel (0) target = $region21
    $region20: #{tpu_custom_call.1} parent=1 // pred_region
      _
    $region21: #{tpu_custom_call.1} parent=1 // pred_fallthru
      _
    // Predicated region
    $region22: #{tpu_custom_call.1} parent=1 // pred_check
      _
    $region23: #{tpu_custom_call.1} parent=1 // pred_check_branch
      %56 = sbr.rel (0) target = $region25
    $region24: #{tpu_custom_call.1} parent=1 // pred_region
      _
    $region25: #{tpu_custom_call.1} parent=1 // pred_fallthru
      _
    // Predicated region
    $region26: #{tpu_custom_call.1} parent=1 // pred_check
      _
    $region27: #{tpu_custom_call.1} parent=1 // pred_check_branch
      %58 = sbr.rel (0) target = $region29
    $region28: #{tpu_custom_call.1} parent=1 // pred_region
      %59 = dma.done [#allocation4], 256
    $region29: #{tpu_custom_call.1} parent=1 // pred_fallthru
      _
    // Predicated region
    $region30: #{tpu_custom_call.1} parent=1 // pred_check
      _
    $region31: #{tpu_custom_call.1} parent=1 // pred_check_branch
      %61 = sbr.rel (0) target = $region33
    $region32: #{tpu_custom_call.1} parent=1 // pred_region
      %62 = dma.done [#allocation6], 1024
    $region33: #{tpu_custom_call.1} parent=1 // pred_fallthru
      _
    // Predicated region
    $region34: #{tpu_custom_call.1} parent=1 // pred_check
      _
    $region35: #{tpu_custom_call.1} parent=1 // pred_check_branch
      %64 = sbr.rel (0) target = $region37
    $region36: #{tpu_custom_call.1} parent=1 // pred_region
      %65 = dma.done [#allocation6], 256
    $region37: #{tpu_custom_call.1} parent=1 // pred_fallthru
      _
    %v67 = vld [vmem:[#allocation3] sm:$0xf]
    %v68 = vld [vmem:[#allocation3 + $0x4] sm:$0xf]
    %v69 = vld [vmem:[#allocation3 + $0x8] sm:$0xf]
    %v70 = vld [vmem:[#allocation3 + $0xc] sm:$0xf]
    %v71 = vld [vmem:[#allocation5] sm:$0xf]
    %v72 = vld [vmem:[#allocation5 + $0x4] sm:$0xf]
    %v73 = vld [vmem:[#allocation5 + $0x8] sm:$0xf]
    %v74 = vld [vmem:[#allocation5 + $0xc] sm:$0xf]
    %v75 = vld [vmem:[#allocation5 + $0x10] sm:$0xf]
    %v76 = vld [vmem:[#allocation5 + $0x14] sm:$0xf]
    %v77 = vld [vmem:[#allocation5 + $0x18] sm:$0xf]
    %v78 = vld [vmem:[#allocation5 + $0x1c] sm:$0xf]
    %v79 = vld [vmem:[#allocation5 + $0x20] sm:$0xf]
    %v80 = vld [vmem:[#allocation5 + $0x24] sm:$0xf]
    %v81 = vld [vmem:[#allocation5 + $0x28] sm:$0xf]
    %v82 = vld [vmem:[#allocation5 + $0x2c] sm:$0xf]
    %v83 = vld [vmem:[#allocation5 + $0x30] sm:$0xf]
    %v84 = vld [vmem:[#allocation5 + $0x34] sm:$0xf]
    %v85 = vld [vmem:[#allocation5 + $0x38] sm:$0xf]
    %v86 = vld [vmem:[#allocation5 + $0x3c] sm:$0xf]
    %v91 = vunpack.c.l.b16 %v67
    %v92 = vunpack.c.l.b16 %v68
    %v93 = vunpack.c.l.b16 %v69
    %v94 = vunpack.c.l.b16 %v70
    %v95 = vpack.c.b16 %v92, %v91
    %v96 = vpack.c.b16 %v94, %v93
    %v115 = vunpack.c.l.b16 %v71
    %v116 = vunpack.c.l.b16 %v72
    %v117 = vunpack.c.l.b16 %v73
    %v118 = vunpack.c.l.b16 %v74
    %v119 = vunpack.c.l.b16 %v75
    %v120 = vunpack.c.l.b16 %v76
    %v121 = vunpack.c.l.b16 %v77
    %v122 = vunpack.c.l.b16 %v78
    %v123 = vunpack.c.l.b16 %v79
    %v124 = vunpack.c.l.b16 %v80
    %v125 = vunpack.c.l.b16 %v81
    %v126 = vunpack.c.l.b16 %v82
    %v127 = vunpack.c.l.b16 %v83
    %v128 = vunpack.c.l.b16 %v84
    %v129 = vunpack.c.l.b16 %v85
    %v130 = vunpack.c.l.b16 %v86
    %v131 = vpack.c.b16 %v116, %v115
    %v132 = vpack.c.b16 %v118, %v117
    %v133 = vpack.c.b16 %v120, %v119
    %v134 = vpack.c.b16 %v122, %v121
    %v135 = vpack.c.b16 %v124, %v123
    %v136 = vpack.c.b16 %v126, %v125
    %v137 = vpack.c.b16 %v128, %v127
    %v138 = vpack.c.b16 %v130, %v129
    %147 = vmatprep.subr.bf16.mxu0 0
    %148 = vmatpush1.bf16.msra.mxu0 %v131
    %149 = vmatprep.subr.bf16.mxu0 0
    %150 = vmatpush1.bf16.msra.mxu0 %v132
    %151 = vmatprep.subr.bf16.mxu0 0
    %152 = vmatpush1.bf16.msra.mxu0 %v133
    %153 = vmatprep.subr.bf16.mxu0 0
    %154 = vmatpush1.bf16.msra.mxu0 %v134
    %155 = vmatprep.subr.bf16.mxu0 0
    %156 = vmatpush1.bf16.msra.mxu0 %v135
    %157 = vmatprep.subr.bf16.mxu0 0
    %158 = vmatpush1.bf16.msra.mxu0 %v136
    %159 = vmatprep.subr.bf16.mxu0 0
    %160 = vmatpush1.bf16.msra.mxu0 %v137
    %161 = vmatprep.subr.bf16.mxu0 0
    %162 = vmatpush1.bf16.msra.mxu0 %v138
    %163 = vmatprep.subr.bf16.mxu0 0
    %164 = vmatpush1.bf16.msra.mxu0 0
    %165 = vmatprep.subr.bf16.mxu0 0
    %166 = vmatpush1.bf16.msra.mxu0 0
    %167 = vmatprep.subr.bf16.mxu0 0
    %168 = vmatpush1.bf16.msra.mxu0 0
    %169 = vmatprep.subr.bf16.mxu0 0
    %170 = vmatpush1.bf16.msra.mxu0 0
    %171 = vmatprep.subr.bf16.mxu0 0
    %172 = vmatpush1.bf16.msra.mxu0 0
    %173 = vmatprep.subr.bf16.mxu0 0
    %174 = vmatpush1.bf16.msra.mxu0 0
    %175 = vmatprep.subr.bf16.mxu0 0
    %176 = vmatpush1.bf16.msra.mxu0 0
    %177 = vmatprep.subr.bf16.mxu0 0
    %178 = vmatpush1.bf16.msra.mxu0 0
    %179 = vmatprep.mubr.bf16.mxu0 0
    %180 = vmatmul.mubr.bf16.gmra.mrb[0].mxu0 %v95
    %v181 = vpop.f32.mrb[0].mxu0
    %v182 = vadd.f32 0.0, %v181
    %v183 = vpop.f32.mrb[0].mxu0
    %v184 = vpop.f32.mrb[0].mxu0
    %v185 = vadd.f32 0.0, %v184
    %v186 = vpop.f32.mrb[0].mxu0
    %187 = vmatprep.mubr.bf16.mxu0 0
    %188 = vmatmul.mubr.bf16.gmra.mrb[0].mxu0 %v96
    %v189 = vpop.f32.mrb[0].mxu0
    %v190 = vadd.f32 0.0, %v189
    %v191 = vpop.f32.mrb[0].mxu0
    %v192 = vpop.f32.mrb[0].mxu0
    %v193 = vadd.f32 0.0, %v192
    %v194 = vpop.f32.mrb[0].mxu0
    %195 = vdwg.mxu0
    %v196 = vld [vmem:[#allocation7] sm:$0xff]
    %v197 = vld [vmem:[#allocation7 + $0x8] sm:$0xff]
    %v198 = vadd.f32 %v182, %v196
    %v199 = vadd.f32 %v185, %v197
    %v200 = vadd.f32 %v190, %v196
    %v201 = vadd.f32 %v193, %v197
    %v202 = vmax.f32 %v198, %v199
    %v203 = vrot.slane %v202, 4
    %v204 = vmax.f32 %v202, %v203
    %v205 = vrot.slane %v204, 2
    %v206 = vmax.f32 %v204, %v205
    %v207 = vrot.slane %v206, 1
    %v208 = vmax.f32 %v206, %v207
    %v209 = vmax.f32 %v200, %v201
    %v210 = vrot.slane %v209, 4
    %v211 = vmax.f32 %v209, %v210
    %v212 = vrot.slane %v211, 2
    %v213 = vmax.f32 %v211, %v212
    %v214 = vrot.slane %v213, 1
    %v215 = vmax.f32 %v213, %v214
    %v216 = vld [vmem:[%s2] sm:$0x1]
    %v218 = vlaneseq
    %v219 = vshrl.u32 %v218, 7
    %v220 = vsub.s32 0, %v219
    %v221 = vrot.slane %v216, %v220
    %v223 = vadd.f32 %v208, %v221
    %v224 = vadd.f32 %v215, %v221
    %vm225 = vcmp.gt.f32.partialorder %v223, 0.0
    %vm226 = vcmp.gt.f32.partialorder %v224, 0.0
    %v227 = vmul.f32 %v223, 0.01
    %v228 = vmul.f32 %v224, 0.01
    %v229 = vsel %vm225, %v223, %v227
    %v230 = vsel %vm226, %v224, %v228
    %v231 = vld [vmem:[%s4] sm:$0x1]
    %v233 = vlaneseq
    %v234 = vshrl.u32 %v233, 7
    %v235 = vsub.s32 0, %v234
    %v236 = vrot.slane %v231, %v235
    %v238 = vmul.f32 %v229, %v236
    %v239 = vmul.f32 %v230, %v236
    %v242 = vrot.slane %v239, 7
    %vm243 = vcmask 1041409
    %v244 = vsel %vm243, %v242, %v238
    %vm246 = vcmask 1041408
    %v247 = vsel %vm246, %v244, 0.0
    %248 = vadd.xlane.f32.xlu0 %v247
    %v249 = vpop.xlane.xlu0 %248
    %v250 = vld [vmem:[#allocation2] sm:$0x1]
    %v252 = vlaneseq
    %v253 = vshrl.u32 %v252, 7
    %v254 = vsub.s32 0, %v253
    %v255 = vrot.slane %v250, %v254
    %v257 = vadd.f32 %v249, %v255
    %v258 = vxor.u32 %v257, 2147483648
    %v259 = vmul.f32 %v258, 1.442695
    %v260 = vpow.pop %v259
    %v261 = vadd.f32 %v260, 1.0
    %v262 = vrcp.pop %v261
    %v263 = vmul.f32 1.0, %v262
    %vm264 = vcmask 1024
    %265 = vst.msk [vmem:[%s6] sm:$0x3] %vm264, %v263
    // Predicated region
    $region38: #{tpu_custom_call.1} parent=1 // pred_check
      _
    $region39: #{tpu_custom_call.1} parent=1 // pred_check_branch
      %267 = sbr.rel (0) target = $region41
    $region40: #{tpu_custom_call.1} parent=1 // pred_region
      _
    $region41: #{tpu_custom_call.1} parent=1 // pred_fallthru
      _
    // Predicated region
    $region42: #{tpu_custom_call.1} parent=1 // pred_check
      _
    $region43: #{tpu_custom_call.1} parent=1 // pred_check_branch
      %269 = sbr.rel (0) target = $region45
    $region44: #{tpu_custom_call.1} parent=1 // pred_region
      _
    $region45: #{tpu_custom_call.1} parent=1 // pred_fallthru
      _
    %270 = vsyncpa [#allocation4], 1
    %271 = vsyncpa [#allocation6], 1

</llo_original>
